<compile_context>
chip_gen: v7x
topology: tpu7x:2x2x1
jax: 0.10.0
libtpu: 0.0.40
codegen_flags: <defaults>
</compile_context>

<pallas_src>
import math

import jax
import jax.numpy as jnp
from jax.experimental import pallas as pl
from jax.experimental.pallas import tpu as pltpu

_GN_EPS = 1e-5


# ----------------------------------------------------------------------------
# In-kernel helpers (operate on loaded VMEM values).
# ----------------------------------------------------------------------------
def _mish(x):
    # x * tanh(softplus(x)), numerically stable softplus.
    sp = jnp.maximum(x, 0.0) + jnp.log(1.0 + jnp.exp(-jnp.abs(x)))
    return x * jnp.tanh(sp)


def _conv1d_same(x, w_flat, b):
    """'same'-padded 1D conv as a single MXU matmul.

    x: (T, Cin); w_flat: (k*Cin, Cout) with rows ordered tap-major; b: (1, Cout).
    """
    T, cin = x.shape
    k = w_flat.shape[0] // cin
    p = k // 2
    if p > 0:
        z = jnp.zeros((p, cin), jnp.float32)
        xp = jnp.concatenate([z, x, z], axis=0)               # (T + 2p, Cin)
    else:
        xp = x
    if k > 1:
        im = jnp.concatenate([xp[dk:dk + T, :] for dk in range(k)], axis=1)
    else:
        im = xp
    return jnp.dot(im, w_flat, preferred_element_type=jnp.float32) + b


def _groupnorm_mish(h, gamma, beta, gmap, gmap_t):
    """GroupNorm (biased variance) + Mish.

    h: (T, C); gamma/beta: (1, C); gmap: (C, G) one-hot; gmap_t: (G, C).
    Group reductions / broadcasts are done with tiny matmuls so no lane-axis
    reshapes are needed inside the kernel.
    """
    T, cout = h.shape
    G = gmap.shape[1]
    cnt = float(T * (cout // G))
    gmean = jnp.dot(jnp.sum(h, axis=0, keepdims=True), gmap,
                    preferred_element_type=jnp.float32) / cnt       # (1, G)
    mean_c = jnp.dot(gmean, gmap_t, preferred_element_type=jnp.float32)
    d = h - mean_c
    gvar = jnp.dot(jnp.sum(d * d, axis=0, keepdims=True), gmap,
                   preferred_element_type=jnp.float32) / cnt        # (1, G)
    var_c = jnp.dot(gvar, gmap_t, preferred_element_type=jnp.float32)
    return _mish(d * jax.lax.rsqrt(var_c + _GN_EPS) * gamma + beta)


# ----------------------------------------------------------------------------
# Kernels.
# ----------------------------------------------------------------------------
def _cond_res_block_kernel(x_ref, cond_ref,
                           w1_ref, b1_ref, g1_ref, be1_ref,
                           wc_ref, bc_ref,
                           w2_ref, b2_ref, g2_ref, be2_ref,
                           wr_ref, br_ref, gmap_ref, gmapt_ref,
                           o_ref):
    x = x_ref[0]                                   # (T, Cin)
    gmap = gmap_ref[...]
    gmap_t = gmapt_ref[...]
    cout = o_ref.shape[2]

    # Conv1dBlock #1
    h = _conv1d_same(x, w1_ref[...], b1_ref[...])
    h = _groupnorm_mish(h, g1_ref[...], be1_ref[...], gmap, gmap_t)

    # FiLM conditioning: scale|bias come from one fused matmul.
    film = jnp.dot(_mish(cond_ref[0]), wc_ref[...],
                   preferred_element_type=jnp.float32) + bc_ref[...]   # (1, 2*Cout)
    h = h * film[:, :cout] + film[:, cout:]

    # Conv1dBlock #2
    h = _conv1d_same(h, w2_ref[...], b2_ref[...])
    h = _groupnorm_mish(h, g2_ref[...], be2_ref[...], gmap, gmap_t)

    # Residual (1x1 conv, or identity passed as eye)
    res = jnp.dot(x, wr_ref[...], preferred_element_type=jnp.float32) + br_ref[...]
    o_ref[0] = h + res


def _downsample_kernel(x_ref, w_ref, b_ref, sel_ref, o_ref):
    # Stride-2 conv (k=3, pad=1) = stride-1 'same' conv, then pick even rows
    # via a selection matmul (layout-aligned, no strided reshapes).
    full = _conv1d_same(x_ref[0], w_ref[...], b_ref[...])     # (T, C)
    o_ref[0] = jnp.dot(sel_ref[...], full, preferred_element_type=jnp.float32)


def _upsample_kernel(x_ref, w_ref, b_ref, se_ref, so_ref, o_ref):
    # ConvTranspose1d(k=4, stride=2, pad=1) decomposed into even/odd phases:
    #   out[2m]   = x[m]  @ W[:,:,1] + x[m-1] @ W[:,:,3] + b
    #   out[2m+1] = x[m+1]@ W[:,:,0] + x[m]   @ W[:,:,2] + b
    x = x_ref[0]                                   # (T, C)
    T = x.shape[0]
    w = w_ref[...]                                 # (4, Cin, Cout)
    zero = jnp.zeros((1, x.shape[1]), jnp.float32)
    x_prev = jnp.concatenate([zero, x[:T - 1, :]], axis=0)
    x_next = jnp.concatenate([x[1:, :], zero], axis=0)
    even = (jnp.dot(x, w[1], preferred_element_type=jnp.float32)
            + jnp.dot(x_prev, w[3], preferred_element_type=jnp.float32)
            + b_ref[...])
    odd = (jnp.dot(x_next, w[0], preferred_element_type=jnp.float32)
           + jnp.dot(x, w[2], preferred_element_type=jnp.float32)
           + b_ref[...])
    # Interleave via selection matmuls: out[2m] = even[m], out[2m+1] = odd[m].
    o_ref[0] = (jnp.dot(se_ref[...], even, preferred_element_type=jnp.float32)
                + jnp.dot(so_ref[...], odd, preferred_element_type=jnp.float32))


def _final_conv_kernel(x_ref, w1_ref, b1_ref, g_ref, be_ref,
                       gmap_ref, gmapt_ref, w2_ref, b2_ref, o_ref):
    h = _conv1d_same(x_ref[0], w1_ref[...], b1_ref[...])
    h = _groupnorm_mish(h, g_ref[...], be_ref[...], gmap_ref[...], gmapt_ref[...])
    o_ref[0] = jnp.dot(h, w2_ref[...], preferred_element_type=jnp.float32) + b2_ref[...]


def _dse_kernel(t_ref, freq_ref, w1s_ref, w1c_ref, b1_ref, w2_ref, b2_ref, o_ref):
    # Sinusoidal positional embedding + Linear -> Mish -> Linear.
    # The concat([sin, cos]) is avoided by splitting W1 into sin/cos halves
    # in the wrapper (weight-side fusion instead of in-kernel lane concat).
    pe = t_ref[...] * freq_ref[...]                          # (B, half)
    h = (jnp.dot(jnp.sin(pe), w1s_ref[...], preferred_element_type=jnp.float32)
         + jnp.dot(jnp.cos(pe), w1c_ref[...], preferred_element_type=jnp.float32)
         + b1_ref[...])
    h = _mish(h)
    o_ref[...] = jnp.dot(h, w2_ref[...], preferred_element_type=jnp.float32) + b2_ref[...]


# ----------------------------------------------------------------------------
# Wrappers (param re-layout + pallas_call plumbing).
# ----------------------------------------------------------------------------
def _rep_spec(shape):
    zeros = (0,) * len(shape)
    return pl.BlockSpec(shape, lambda b, _z=zeros: _z)


def _group_onehot(c, n_groups):
    cg = c // n_groups
    return (jnp.arange(c)[:, None] // cg
            == jnp.arange(n_groups)[None, :]).astype(jnp.float32)


def _flat_conv_w(w):
    """PyTorch Conv1d weight (Cout, Cin, k) -> (k*Cin, Cout), tap-major rows."""
    return jnp.transpose(w, (2, 1, 0)).reshape(-1, w.shape[0])


def cond_res_block(p, x, cond, *, n_groups):
    B, T, cin = x.shape
    cout = p['block0']['w'].shape[0]
    cond_dim = cond.shape[-1]

    w1 = _flat_conv_w(p['block0']['w'])
    b1 = p['block0']['b'].reshape(1, cout)
    g1 = p['block0']['gamma'].reshape(1, cout)
    be1 = p['block0']['beta'].reshape(1, cout)
    w2 = _flat_conv_w(p['block1']['w'])
    b2 = p['block1']['b'].reshape(1, cout)
    g2 = p['block1']['gamma'].reshape(1, cout)
    be2 = p['block1']['beta'].reshape(1, cout)
    wc = p['cond_w'].T                              # (cond_dim, 2*cout)
    bc = p['cond_b'].reshape(1, 2 * cout)
    if p['res_w'] is not None:
        wr = p['res_w'][:, :, 0].T                  # (cin, cout)
        br = p['res_b'].reshape(1, cout)
    else:
        wr = jnp.eye(cin, dtype=jnp.float32)
        br = jnp.zeros((1, cout), jnp.float32)
    gmap = _group_onehot(cout, n_groups)
    gmap_t = gmap.T
    cond3 = cond.reshape(B, 1, cond_dim)

    return pl.pallas_call(
        _cond_res_block_kernel,
        out_shape=jax.ShapeDtypeStruct((B, T, cout), jnp.float32),
        grid=(B,),
        in_specs=[
            pl.BlockSpec((1, T, cin), lambda b: (b, 0, 0)),
            pl.BlockSpec((1, 1, cond_dim), lambda b: (b, 0, 0)),
            _rep_spec(w1.shape), _rep_spec((1, cout)), _rep_spec((1, cout)),
            _rep_spec((1, cout)),
            _rep_spec(wc.shape), _rep_spec((1, 2 * cout)),
            _rep_spec(w2.shape), _rep_spec((1, cout)), _rep_spec((1, cout)),
            _rep_spec((1, cout)),
            _rep_spec((cin, cout)), _rep_spec((1, cout)),
            _rep_spec((cout, n_groups)), _rep_spec((n_groups, cout)),
        ],
        out_specs=pl.BlockSpec((1, T, cout), lambda b: (b, 0, 0)),
        compiler_params=pltpu.CompilerParams(dimension_semantics=("parallel",)),
    )(x, cond3, w1, b1, g1, be1, wc, bc, w2, b2, g2, be2, wr, br, gmap, gmap_t)


def downsample1d(p, x):
    B, T, C = x.shape
    w = _flat_conv_w(p['w'])                        # (3*C, C)
    b = p['b'].reshape(1, C)
    To = T // 2
    sel = (2 * jnp.arange(To)[:, None] == jnp.arange(T)[None, :]).astype(jnp.float32)
    return pl.pallas_call(
        _downsample_kernel,
        out_shape=jax.ShapeDtypeStruct((B, To, C), jnp.float32),
        grid=(B,),
        in_specs=[pl.BlockSpec((1, T, C), lambda b_: (b_, 0, 0)),
                  _rep_spec(w.shape), _rep_spec((1, C)), _rep_spec((To, T))],
        out_specs=pl.BlockSpec((1, To, C), lambda b_: (b_, 0, 0)),
        compiler_params=pltpu.CompilerParams(dimension_semantics=("parallel",)),
    )(x, w, b, sel)


def upsample1d(p, x):
    B, T, C = x.shape
    w = jnp.transpose(p['w'], (2, 0, 1))            # (4, Cin, Cout) from (in,out,k)
    b = p['b'].reshape(1, C)
    To = 2 * T
    j = jnp.arange(To)[:, None]
    m = jnp.arange(T)[None, :]
    se = (j == 2 * m).astype(jnp.float32)
    so = (j == 2 * m + 1).astype(jnp.float32)
    return pl.pallas_call(
        _upsample_kernel,
        out_shape=jax.ShapeDtypeStruct((B, To, C), jnp.float32),
        grid=(B,),
        in_specs=[pl.BlockSpec((1, T, C), lambda b_: (b_, 0, 0)),
                  _rep_spec((4, C, C)), _rep_spec((1, C)),
                  _rep_spec((To, T)), _rep_spec((To, T))],
        out_specs=pl.BlockSpec((1, To, C), lambda b_: (b_, 0, 0)),
        compiler_params=pltpu.CompilerParams(dimension_semantics=("parallel",)),
    )(x, w, b, se, so)


def final_conv(p, x, *, n_groups):
    B, T, C = x.shape
    out_dim = p['w'].shape[0]
    w1 = _flat_conv_w(p['block']['w'])
    b1 = p['block']['b'].reshape(1, C)
    g = p['block']['gamma'].reshape(1, C)
    be = p['block']['beta'].reshape(1, C)
    gmap = _group_onehot(C, n_groups)
    w2 = p['w'][:, :, 0].T                          # (C, out_dim)
    b2 = p['b'].reshape(1, out_dim)
    return pl.pallas_call(
        _final_conv_kernel,
        out_shape=jax.ShapeDtypeStruct((B, T, out_dim), jnp.float32),
        grid=(B,),
        in_specs=[pl.BlockSpec((1, T, C), lambda b_: (b_, 0, 0)),
                  _rep_spec(w1.shape), _rep_spec((1, C)), _rep_spec((1, C)),
                  _rep_spec((1, C)),
                  _rep_spec((C, n_groups)), _rep_spec((n_groups, C)),
                  _rep_spec((C, out_dim)), _rep_spec((1, out_dim))],
        out_specs=pl.BlockSpec((1, T, out_dim), lambda b_: (b_, 0, 0)),
        compiler_params=pltpu.CompilerParams(dimension_semantics=("parallel",)),
    )(x, w1, b1, g, be, gmap, gmap.T, w2, b2)


def diffusion_step_encode(p, t_b1):
    dsed = p['w1'].shape[1]
    half = dsed // 2
    scale = math.log(10000.0) / (half - 1)
    freqs = jnp.exp(-scale * jnp.arange(half, dtype=jnp.float32)).reshape(1, half)
    w1 = p['w1'].T                                  # (dsed, 4*dsed)
    w1s, w1c = w1[:half], w1[half:]
    b1 = p['b1'].reshape(1, -1)
    w2 = p['w2'].T                                  # (4*dsed, dsed)
    b2 = p['b2'].reshape(1, -1)
    B = t_b1.shape[0]
    return pl.pallas_call(
        _dse_kernel,
        out_shape=jax.ShapeDtypeStruct((B, dsed), jnp.float32),
    )(t_b1, freqs, w1s, w1c, b1, w2, b2)


def unet_forward(params, sample, timestep, global_cond, *, n_groups):
    """sample: (B, T, input_dim); timestep: scalar; global_cond: (B, gcd)."""
    B, T, _ = sample.shape
    # NOTE: PyTorch's moveaxis(-1,-2) puts channels first; our kernels run
    # channels-last, which is exactly the original (B, T, C) layout, so no
    # transpose is needed on either side.
    x = sample.astype(jnp.float32)
    t = jnp.full((B, 1), timestep, dtype=jnp.float32)
    gf = diffusion_step_encode(params['dse'], t)                    # (B, dsed)
    gf = jnp.concatenate([gf, global_cond.astype(jnp.float32)], axis=-1)

    h = []
    for lvl in params['down']:
        x = cond_res_block(lvl['res1'], x, gf, n_groups=n_groups)
        x = cond_res_block(lvl['res2'], x, gf, n_groups=n_groups)
        h.append(x)
        if lvl['down'] is not None:
            x = downsample1d(lvl['down'], x)
    for mp in params['mid']:
        x = cond_res_block(mp, x, gf, n_groups=n_groups)
    for lvl in params['up']:
        x = jnp.concatenate([x, h.pop()], axis=-1)   # channel concat (plumbing)
        x = cond_res_block(lvl['res1'], x, gf, n_groups=n_groups)
        x = cond_res_block(lvl['res2'], x, gf, n_groups=n_groups)
        if lvl['up'] is not None:
            x = upsample1d(lvl['up'], x)
    return final_conv(params['final'], x, n_groups=n_groups)


# ----------------------------------------------------------------------------
# Parameter init (PyTorch-layout weights, single source of truth).
# ----------------------------------------------------------------------------
def init_params(key, input_dim, global_cond_dim, dsed, down_dims,
                kernel_size, n_groups):
    keys = iter(jax.random.split(key, 256))

    def normal(shape, scale):
        return scale * jax.random.normal(next(keys), shape, jnp.float32)

    def conv_p(cout, cin, k):
        return {'w': normal((cout, cin, k), 1.0 / math.sqrt(cin * k)),
                'b': normal((cout,), 0.05)}

    def conv_block_p(cin, cout, k):
        p = conv_p(cout, cin, k)
        p['gamma'] = 1.0 + normal((cout,), 0.1)
        p['beta'] = normal((cout,), 0.1)
        return p

    cond_dim = dsed + global_cond_dim

    def res_block_p(cin, cout):
        p = {'block0': conv_block_p(cin, cout, kernel_size),
             'block1': conv_block_p(cout, cout, kernel_size),
             'cond_w': normal((2 * cout, cond_dim), 1.0 / math.sqrt(cond_dim)),
             'cond_b': normal((2 * cout,), 0.05)}
        if cin != cout:
            rp = conv_p(cout, cin, 1)
            p['res_w'], p['res_b'] = rp['w'], rp['b']
        else:
            p['res_w'], p['res_b'] = None, None
        return p

    all_dims = [input_dim] + list(down_dims)
    in_out = list(zip(all_dims[:-1], all_dims[1:]))
    mid_dim = all_dims[-1]
    start_dim = down_dims[0]

    down = []
    for ind, (di, do) in enumerate(in_out):
        is_last = ind >= len(in_out) - 1
        down.append({'res1': res_block_p(di, do),
                     'res2': res_block_p(do, do),
                     'down': None if is_last else conv_p(do, do, 3)})
    mid = [res_block_p(mid_dim, mid_dim), res_block_p(mid_dim, mid_dim)]
    up = []
    for ind, (di, do) in enumerate(reversed(in_out[1:])):
        is_last = ind >= len(in_out) - 1
        up.append({'res1': res_block_p(do * 2, di),
                   'res2': res_block_p(di, di),
                   'up': None if is_last else
                         {'w': normal((di, di, 4), 1.0 / math.sqrt(di * 4)),
                          'b': normal((di,), 0.05)}})
    fc = conv_p(input_dim, start_dim, 1)
    final = {'block': conv_block_p(start_dim, start_dim, kernel_size),
             'w': fc['w'], 'b': fc['b']}
    dse = {'w1': normal((dsed * 4, dsed), 1.0 / math.sqrt(dsed)),
           'b1': normal((dsed * 4,), 0.05),
           'w2': normal((dsed, dsed * 4), 1.0 / math.sqrt(dsed * 4)),
           'b2': normal((dsed,), 0.05)}
    return {'dse': dse, 'down': down, 'mid': mid, 'up': up, 'final': final}


# ----------------------------------------------------------------------------
# Pure-JAX reference (direct transcription of the PyTorch module).
# ----------------------------------------------------------------------------
_HI = jax.lax.Precision.HIGHEST


def _ref_mish(x):
    return x * jnp.tanh(jax.nn.softplus(x))


def _ref_conv1d(x, w, b, stride=1, padding=0):
    out = jax.lax.conv_general_dilated(
        x, w, window_strides=(stride,), padding=[(padding, padding)],
        dimension_numbers=('NCH', 'OIH', 'NCH'), precision=_HI)
    return out + b[None, :, None]


def _ref_groupnorm(x, gamma, beta, n_groups, eps=_GN_EPS):
    B, C, T = x.shape
    xg = x.reshape(B, n_groups, C // n_groups, T)
    mean = xg.mean(axis=(2, 3), keepdims=True)
    var = xg.var(axis=(2, 3), keepdims=True)
    xn = ((xg - mean) / jnp.sqrt(var + eps)).reshape(B, C, T)
    return xn * gamma[None, :, None] + beta[None, :, None]


def _ref_conv_block(p, x, n_groups):
    h = _ref_conv1d(x, p['w'], p['b'], padding=p['w'].shape[-1] // 2)
    return _ref_mish(_ref_groupnorm(h, p['gamma'], p['beta'], n_groups))


def _ref_res_block(p, x, cond, n_groups):
    out = _ref_conv_block(p['block0'], x, n_groups)
    embed = jnp.dot(_ref_mish(cond), p['cond_w'].T, precision=_HI) + p['cond_b']
    cout = out.shape[1]
    embed = embed.reshape(x.shape[0], 2, cout, 1)
    out = embed[:, 0] * out + embed[:, 1]
    out = _ref_conv_block(p['block1'], out, n_groups)
    if p['res_w'] is not None:
        res = _ref_conv1d(x, p['res_w'], p['res_b'], padding=0)
    else:
        res = x
    return out + res


def _ref_upsample(p, x):
    w = p['w']                                       # (Cin, Cout, k)
    k = w.shape[-1]
    w2 = jnp.flip(w, axis=-1).transpose(1, 0, 2)     # (Cout, Cin, k)
    out = jax.lax.conv_general_dilated(
        x, w2, window_strides=(1,), padding=[(k - 2, k - 2)],
        lhs_dilation=(2,), dimension_numbers=('NCH', 'OIH', 'NCH'),
        precision=_HI)
    return out + p['b'][None, :, None]


def _ref_dse(p, timesteps):
    dsed = p['w1'].shape[1]
    half = dsed // 2
    scale = math.log(10000.0) / (half - 1)
    freqs = jnp.exp(-scale * jnp.arange(half, dtype=jnp.float32))
    pe = timesteps[:, None] * freqs[None, :]
    pe = jnp.concatenate([jnp.sin(pe), jnp.cos(pe)], axis=-1)
    h = _ref_mish(jnp.dot(pe, p['w1'].T, precision=_HI) + p['b1'])
    return jnp.dot(h, p['w2'].T, precision=_HI) + p['b2']


def _ref_unet(params, sample, timestep, global_cond, *, n_groups):
    B = sample.shape[0]
    x = jnp.moveaxis(sample.astype(jnp.float32), -1, -2)         # (B, C, T)
    ts = jnp.full((B,), timestep, dtype=jnp.float32)
    gf = _ref_dse(params['dse'], ts)
    gf = jnp.concatenate([gf, global_cond.astype(jnp.float32)], axis=-1)
    h = []
    for lvl in params['down']:
        x = _ref_res_block(lvl['res1'], x, gf, n_groups)
        x = _ref_res_block(lvl['res2'], x, gf, n_groups)
        h.append(x)
        if lvl['down'] is not None:
            x = _ref_conv1d(x, lvl['down']['w'], lvl['down']['b'],
                            stride=2, padding=1)
    for mp in params['mid']:
        x = _ref_res_block(mp, x, gf, n_groups)
    for lvl in params['up']:
        x = jnp.concatenate([x, h.pop()], axis=1)
        x = _ref_res_block(lvl['res1'], x, gf, n_groups)
        x = _ref_res_block(lvl['res2'], x, gf, n_groups)
        if lvl['up'] is not None:
            x = _ref_upsample(lvl['up'], x)
    x = _ref_conv_block(params['final']['block'], x, n_groups)
    x = _ref_conv1d(x, params['final']['w'], params['final']['b'], padding=0)
    return jnp.moveaxis(x, -1, -2)


# ----------------------------------------------------------------------------
if __name__ == "__main__":
    B, T = 2, 16
    INPUT_DIM = 4
    GLOBAL_COND_DIM = 16
    DSED = 32
    DOWN_DIMS = [32, 64]
    KERNEL_SIZE = 5
    N_GROUPS = 8

    root = jax.random.PRNGKey(0)
    pkey, skey, ckey = jax.random.split(root, 3)
    params = init_params(pkey, INPUT_DIM, GLOBAL_COND_DIM, DSED, DOWN_DIMS,
                         KERNEL_SIZE, N_GROUPS)
    sample = jax.random.normal(skey, (B, T, INPUT_DIM), jnp.float32)
    global_cond = jax.random.normal(ckey, (B, GLOBAL_COND_DIM), jnp.float32)
    timestep = 10

    out = unet_forward(params, sample, timestep, global_cond, n_groups=N_GROUPS)
    out = jax.block_until_ready(out)
    assert out.shape == (B, T, INPUT_DIM)

    ref = jax.block_until_ready(
        _ref_unet(params, sample, timestep, global_cond, n_groups=N_GROUPS))
    max_err = float(jnp.max(jnp.abs(out - ref)))
    assert max_err < 3e-3, f"mismatch vs reference: {max_err}"
    print("KERNEL_OK")
</pallas_src>

<mosaic_0001>
module attributes {stable_mosaic.version = 11 : i64} {
  func.func @_dse_kernel(%arg0: memref<2x1xf32, #tpu.memory_space<vmem>>, %arg1: memref<1x16xf32, #tpu.memory_space<vmem>>, %arg2: memref<16x128xf32, #tpu.memory_space<vmem>>, %arg3: memref<16x128xf32, #tpu.memory_space<vmem>>, %arg4: memref<1x128xf32, #tpu.memory_space<vmem>>, %arg5: memref<128x32xf32, #tpu.memory_space<vmem>>, %arg6: memref<1x32xf32, #tpu.memory_space<vmem>>, %arg7: memref<2x32xf32, #tpu.memory_space<vmem>>) attributes {dimension_semantics = [], scalar_prefetch = 0 : i64, scratch_operands = 0 : i64, tpu.core_type = #tpu.core_type<tc>} {
    %c0 = arith.constant 0 : index
    %c0_0 = arith.constant 0 : index
    %0 = vector.load %arg0[%c0, %c0_0] : memref<2x1xf32, #tpu.memory_space<vmem>>, vector<2x1xf32>
    %c0_1 = arith.constant 0 : index
    %c0_2 = arith.constant 0 : index
    %1 = vector.load %arg1[%c0_1, %c0_2] : memref<1x16xf32, #tpu.memory_space<vmem>>, vector<1x16xf32>
    %2 = vector.broadcast %0 : vector<2x1xf32> to vector<2x16xf32>
    %3 = vector.broadcast %1 : vector<1x16xf32> to vector<2x16xf32>
    %4 = arith.mulf %2, %3 : vector<2x16xf32>
    %5 = math.sin %4 : vector<2x16xf32>
    %c0_3 = arith.constant 0 : index
    %c0_4 = arith.constant 0 : index
    %6 = vector.load %arg2[%c0_3, %c0_4] : memref<16x128xf32, #tpu.memory_space<vmem>>, vector<16x128xf32>
    %cst = arith.constant dense<0.000000e+00> : vector<2x128xf32>
    %7 = tpu.matmul %5, %6, %cst {dimension_numbers = #tpu.dot_dimension_numbers<[1], [0], [0], [1], [0, 0, 1, 1], [], []>} : vector<2x16xf32>, vector<16x128xf32>, vector<2x128xf32> -> vector<2x128xf32>
    %8 = math.cos %4 : vector<2x16xf32>
    %c0_5 = arith.constant 0 : index
    %c0_6 = arith.constant 0 : index
    %9 = vector.load %arg3[%c0_5, %c0_6] : memref<16x128xf32, #tpu.memory_space<vmem>>, vector<16x128xf32>
    %cst_7 = arith.constant dense<0.000000e+00> : vector<2x128xf32>
    %10 = tpu.matmul %8, %9, %cst_7 {dimension_numbers = #tpu.dot_dimension_numbers<[1], [0], [0], [1], [0, 0, 1, 1], [], []>} : vector<2x16xf32>, vector<16x128xf32>, vector<2x128xf32> -> vector<2x128xf32>
    %11 = arith.addf %7, %10 : vector<2x128xf32>
    %c0_8 = arith.constant 0 : index
    %c0_9 = arith.constant 0 : index
    %12 = vector.load %arg4[%c0_8, %c0_9] : memref<1x128xf32, #tpu.memory_space<vmem>>, vector<1x128xf32>
    %13 = vector.broadcast %12 : vector<1x128xf32> to vector<2x128xf32>
    %14 = arith.addf %11, %13 : vector<2x128xf32>
    %cst_10 = arith.constant 0.000000e+00 : f32
    %15 = vector.broadcast %cst_10 : f32 to vector<2x128xf32>
    %16 = arith.maximumf %14, %15 : vector<2x128xf32>
    %17 = math.absf %14 : vector<2x128xf32>
    %cst_11 = arith.constant 0.000000e+00 : f32
    %18 = vector.broadcast %cst_11 : f32 to vector<2x128xf32>
    %19 = arith.subf %18, %17 : vector<2x128xf32>
    %20 = math.exp %19 : vector<2x128xf32>
    %cst_12 = arith.constant 1.000000e+00 : f32
    %21 = vector.broadcast %cst_12 : f32 to vector<2x128xf32>
    %22 = arith.addf %21, %20 : vector<2x128xf32>
    %23 = math.log %22 : vector<2x128xf32>
    %24 = arith.addf %16, %23 : vector<2x128xf32>
    %25 = math.tanh %24 : vector<2x128xf32>
    %26 = arith.mulf %14, %25 : vector<2x128xf32>
    %c0_13 = arith.constant 0 : index
    %c0_14 = arith.constant 0 : index
    %27 = vector.load %arg5[%c0_13, %c0_14] : memref<128x32xf32, #tpu.memory_space<vmem>>, vector<128x32xf32>
    %cst_15 = arith.constant dense<0.000000e+00> : vector<2x32xf32>
    %28 = tpu.matmul %26, %27, %cst_15 {dimension_numbers = #tpu.dot_dimension_numbers<[1], [0], [0], [1], [0, 0, 1, 1], [], []>} : vector<2x128xf32>, vector<128x32xf32>, vector<2x32xf32> -> vector<2x32xf32>
    %c0_16 = arith.constant 0 : index
    %c0_17 = arith.constant 0 : index
    %29 = vector.load %arg6[%c0_16, %c0_17] : memref<1x32xf32, #tpu.memory_space<vmem>>, vector<1x32xf32>
    %30 = vector.broadcast %29 : vector<1x32xf32> to vector<2x32xf32>
    %31 = arith.addf %28, %30 : vector<2x32xf32>
    %c0_18 = arith.constant 0 : index
    %c0_19 = arith.constant 0 : index
    %32 = vector.load %arg7[%c0_18, %c0_19] : memref<2x32xf32, #tpu.memory_space<vmem>>, vector<2x32xf32>
    tpu.vector_store %arg7[%c0_18, %c0_19], %31 {strides = array<i32>} : memref<2x32xf32, #tpu.memory_space<vmem>>, vector<2x32xf32>,
    return
  }
}

</mosaic_0001>

<llo_original>
// kernel: tpu_custom_call.1
$region0: #{tpu_custom_call.1}
  #allocation0 [shape = 'u32[]', space=smem, size = 0x4, offset = 0x4, fixed_abs, tag = 'smem constant byte address 0x4 - core index']
  #allocation1 [shape = 'u32[144,128]{1,0:T(1,128)}', space=vmem, size = 0x12000, scoped, tag = 'internal scratch']
  %s0 = inlined_call_operand.vmem [shape: f32[2,1], index: 0, kind: input, shape index: {}]
  %s1 = inlined_call_operand.vmem [shape: f32[1,16], index: 1, kind: input, shape index: {}]
  %s2 = inlined_call_operand.vmem [shape: f32[16,128], index: 2, kind: input, shape index: {}]
  %s3 = inlined_call_operand.vmem [shape: f32[16,128], index: 3, kind: input, shape index: {}]
  %s4 = inlined_call_operand.vmem [shape: f32[1,128], index: 4, kind: input, shape index: {}]
  %s5 = inlined_call_operand.vmem [shape: f32[128,32], index: 5, kind: input, shape index: {}]
  %s6 = inlined_call_operand.vmem [shape: f32[1,32], index: 6, kind: input, shape index: {}]
  %s7 = inlined_call_operand.hbm [shape: f32[2,32], index: 7, kind: output, shape index: {}]
  %s8 = sld [smem:[#allocation0]]
  $region38: #{tpu_custom_call.1} parent=0
    _
  %s10 = ssub.s32 1, %s8
  %s11 = scalar_select 0, %s10, %s8
  $region1: #{tpu_custom_call.1} parent=0
    #allocation2 [shape = 'u8[1024]{0}', space=vmem, size = 0x400, scoped, tag = 'output window, operand 0, single buffered']
    #allocation3 [shape = 's32[1]{0}', space=sflag, size = 0x4, scoped, tag = 'scoped memory for tpu_custom_call.1']
    %12 = vsyncpa [#allocation3], 0
    // Predicated region
    $region2: #{tpu_custom_call.1} parent=1 // pred_check
      _
    $region3: #{tpu_custom_call.1} parent=1 // pred_check_branch
      %14 = sbr.rel (0) target = $region5
    $region4: #{tpu_custom_call.1} parent=1 // pred_region
      _
    $region5: #{tpu_custom_call.1} parent=1 // pred_fallthru
      _
    // Predicated region
    $region6: #{tpu_custom_call.1} parent=1 // pred_check
      _
    $region7: #{tpu_custom_call.1} parent=1 // pred_check_branch
      %16 = sbr.rel (0) target = $region9
    $region8: #{tpu_custom_call.1} parent=1 // pred_region
      _
    $region9: #{tpu_custom_call.1} parent=1 // pred_fallthru
      _
    // Predicated region
    $region10: #{tpu_custom_call.1} parent=1 // pred_check
      _
    $region11: #{tpu_custom_call.1} parent=1 // pred_check_branch
      %18 = sbr.rel (0) target = $region13
    $region12: #{tpu_custom_call.1} parent=1 // pred_region
      _
    $region13: #{tpu_custom_call.1} parent=1 // pred_fallthru
      _
    // Predicated region
    $region14: #{tpu_custom_call.1} parent=1 // pred_check
      _
    $region15: #{tpu_custom_call.1} parent=1 // pred_check_branch
      %20 = sbr.rel (0) target = $region17
    $region16: #{tpu_custom_call.1} parent=1 // pred_region
      _
    $region17: #{tpu_custom_call.1} parent=1 // pred_fallthru
      _
    // Predicated region
    $region18: #{tpu_custom_call.1} parent=1 // pred_check
      _
    $region19: #{tpu_custom_call.1} parent=1 // pred_check_branch
      %22 = sbr.rel (0) target = $region21
    $region20: #{tpu_custom_call.1} parent=1 // pred_region
      _
    $region21: #{tpu_custom_call.1} parent=1 // pred_fallthru
      _
    // Predicated region
    $region22: #{tpu_custom_call.1} parent=1 // pred_check
      _
    $region23: #{tpu_custom_call.1} parent=1 // pred_check_branch
      %24 = sbr.rel (0) target = $region25
    $region24: #{tpu_custom_call.1} parent=1 // pred_region
      _
    $region25: #{tpu_custom_call.1} parent=1 // pred_fallthru
      _
    // Predicated region
    $region26: #{tpu_custom_call.1} parent=1 // pred_check
      _
    $region27: #{tpu_custom_call.1} parent=1 // pred_check_branch
      %26 = sbr.rel (0) target = $region29
    $region28: #{tpu_custom_call.1} parent=1 // pred_region
      _
    $region29: #{tpu_custom_call.1} parent=1 // pred_fallthru
      _
    %v27 = vld [vmem:[%s0] sm:$0x3]
    %v28 = vld [vmem:[%s1] sm:$0x1]
    %30 = vset.pattern.permute.xlu0 0
    %31 = vperm.xlu0 %30, %v27
    %v32 = vpop.permute.xlu0 %31
    %v35 = vlaneseq
    %v36 = vshrl.u32 %v35, 7
    %v37 = vsub.s32 0, %v36
    %v38 = vrot.slane %v28, %v37
    %v40 = vmul.f32 %v32, %v38
    %v41 = vand.u32 2147483647, %v40
    %vm42 = vcmp.le.f32.partialorder %v41, 0.7853982
    %vm43 = vcmp.lt.s32.totalorder %v40, 0
    %v44 = vand.u32 %v40, 2139095040
    %v45 = vshrl.u32 %v44, 23
    %v46 = vsub.s32 %v45, 127
    %v47 = vand.u32 2147483647, %v40
    %v48 = vand.u32 %v47, 8388607
    %v49 = vor.u32 %v48, 8388608
    %v50 = vsub.s32 0, %v49
    %v51 = vadd.s32 %v46, 1
    %vm52 = vcmp.gt.s32.totalorder %v51, 0
    %v53 = vsel %vm52, %v51, 0
    %v54 = vshrl.u32 %v53, 5
    %v55 = vand.u32 %v53, 31
    %v56 = vsub.s32 32, %v55
    %v57 = vshrl.u32 683565275, %v56
    %v58 = vshll.u32 683565275, %v55
    %v59 = vshrl.u32 2475754826, %v56
    %v60 = vor.u32 %v58, %v59
    %v61 = vshll.u32 2475754826, %v55
    %v62 = vshrl.u32 2131351028, %v56
    %v63 = vor.u32 %v61, %v62
    %v64 = vshll.u32 2131351028, %v55
    %v65 = vshrl.u32 2102212464, %v56
    %v66 = vor.u32 %v64, %v65
    %v67 = vshll.u32 2102212464, %v55
    %v68 = vshrl.u32 920167782, %v56
    %v69 = vor.u32 %v67, %v68
    %v70 = vshll.u32 920167782, %v55
    %v71 = vshrl.u32 1326507024, %v56
    %v72 = vor.u32 %v70, %v71
    %vm73 = vcmp.lt.s32.totalorder %v54, 1
    %vm74 = vcmp.lt.s32.totalorder %v54, 2
    %vm75 = vcmp.lt.s32.totalorder %v54, 3
    %vm76 = vcmp.lt.s32.totalorder %v54, 4
    %v77 = vsel %vm73, %v57, %v60
    %v78 = vsel %vm76, %v66, 2102212464
    %v79 = vsel %vm75, %v63, %v78
    %v80 = vsel %vm74, %v77, %v79
    %v81 = vsel %vm73, %v60, %v63
    %v82 = vsel %vm76, %v69, 920167782
    %v83 = vsel %vm75, %v66, %v82
    %v84 = vsel %vm74, %v81, %v83
    %v85 = vsel %vm73, %v63, %v66
    %v86 = vsel %vm76, %v72, 1326507024
    %v87 = vsel %vm75, %v69, %v86
    %v88 = vsel %vm74, %v85, %v87
    %v89 = vshll.u32 %v49, 8
    %v90 = vmul.u32.u64.compose %v89, %v88
    %v91 = vextract.low.u32 %v90
    %v92 = vextract.high.u32 %v90
    %v93 = vmul.u32.u64.compose %v89, %v84
    %v94 = vextract.low.u32 %v93
    %v95 = vextract.high.u32 %v93
    %v96 = vmul.u32 %v89, %v80
    %v97 = vadd.s32 %v92, %v94
    %vm98 = vc.u32 %v92, %v94
    %v99 = vadd.s32 %v95, 1
    %v100 = vsel %vm98, %v99, %v95
    %v101 = vadd.s32 %v96, %v100
    %v102 = vadd.s32 %v101, 536870912
    %v103 = vshrl.u32 %v102, 30
    %v104 = vshll.u32 %v103, 30
    %v105 = vsub.s32 %v101, %v104
    %vm106 = vcmp.lt.s32.totalorder %v105, 0
    %v107 = vsub.s32 0, %v105
    %v108 = vsel %vm106, %v107, %v105
    %v109 = vclz %v108
    %v110 = vsub.s32 %v109, 2
    %vm111 = vcmp.gt.s32.totalorder 0, %v110
    %v112 = vsel %vm111, 0, %v110
    %v113 = vsub.s32 32, %v112
    %v114 = vshll.u32 %v105, %v112
    %v115 = vshrl.u32 %v97, %v113
    %v116 = vor.u32 %v114, %v115
    %v117 = vsub.s32 4294967266, %v112
    %v118 = vadd.s32 %v117, 127
    %v119 = vshll.u32 %v118, 23
    %v120 = vor.u32 4788187, %v119
    %v121 = vand.u32 2147483647, %v120
    %v123 = vcvt.s32.f32 %v116
    %v124 = vmul.f32 %v123, %v121
    %v125 = vxor.u32 %v124, 2147483648
    %v126 = vsel %vm43, %v125, %v124
    %v127 = vsub.s32 4, %v103
    %v128 = vsel %vm43, %v127, %v103
    %v129 = vsel %vm42, %v40, %v126
    %v130 = vsel %vm42, 0, %v128
    %v131 = vcosq.f32.pop %v129
    %v132 = vsinq.f32.pop %v129
    %vm133 = vweird.f32 %v40
    %v134 = vadd.s32 %v130, 3
    %v135 = vand.u32 %v134, 3
    %vm136 = vcmp.lt.s32.totalorder %v135, 2
    %vm137 = vcmp.eq.s32.totalorder %v135, 0
    %v138 = vxor.u32 %v132, 2147483648
    %v139 = vsel %vm137, %v131, %v138
    %vm140 = vcmp.eq.s32.totalorder %v135, 2
    %v141 = vxor.u32 %v131, 2147483648
    %v142 = vsel %vm140, %v141, %v132
    %v143 = vsel %vm136, %v139, %v142
    %v144 = vsel %vm133, nan, %v143
    %v145 = vld [vmem:[%s2] sm:$0xff]
    %v146 = vld [vmem:[%s2 + $0x8] sm:$0xff]
    %v147 = vand.u32 2147483647, %v40
    %vm148 = vcmp.le.f32.partialorder %v147, 0.7853982
    %vm149 = vcmp.lt.s32.totalorder %v40, 0
    %v150 = vand.u32 %v40, 2139095040
    %v151 = vshrl.u32 %v150, 23
    %v152 = vsub.s32 %v151, 127
    %v153 = vand.u32 2147483647, %v40
    %v154 = vand.u32 %v153, 8388607
    %v155 = vor.u32 %v154, 8388608
    %v156 = vsub.s32 0, %v155
    %v157 = vadd.s32 %v152, 1
    %vm158 = vcmp.gt.s32.totalorder %v157, 0
    %v159 = vsel %vm158, %v157, 0
    %v160 = vshrl.u32 %v159, 5
    %v161 = vand.u32 %v159, 31
    %v162 = vsub.s32 32, %v161
    %v163 = vshrl.u32 683565275, %v162
    %v164 = vshll.u32 683565275, %v161
    %v165 = vshrl.u32 2475754826, %v162
    %v166 = vor.u32 %v164, %v165
    %v167 = vshll.u32 2475754826, %v161
    %v168 = vshrl.u32 2131351028, %v162
    %v169 = vor.u32 %v167, %v168
    %v170 = vshll.u32 2131351028, %v161
    %v171 = vshrl.u32 2102212464, %v162
    %v172 = vor.u32 %v170, %v171
    %v173 = vshll.u32 2102212464, %v161
    %v174 = vshrl.u32 920167782, %v162
    %v175 = vor.u32 %v173, %v174
    %v176 = vshll.u32 920167782, %v161
    %v177 = vshrl.u32 1326507024, %v162
    %v178 = vor.u32 %v176, %v177
    %vm179 = vcmp.lt.s32.totalorder %v160, 1
    %vm180 = vcmp.lt.s32.totalorder %v160, 2
    %vm181 = vcmp.lt.s32.totalorder %v160, 3
    %vm182 = vcmp.lt.s32.totalorder %v160, 4
    %v183 = vsel %vm179, %v163, %v166
    %v184 = vsel %vm182, %v172, 2102212464
    %v185 = vsel %vm181, %v169, %v184
    %v186 = vsel %vm180, %v183, %v185
    %v187 = vsel %vm179, %v166, %v169
    %v188 = vsel %vm182, %v175, 920167782
    %v189 = vsel %vm181, %v172, %v188
    %v190 = vsel %vm180, %v187, %v189
    %v191 = vsel %vm179, %v169, %v172
    %v192 = vsel %vm182, %v178, 1326507024
    %v193 = vsel %vm181, %v175, %v192
    %v194 = vsel %vm180, %v191, %v193
    %v195 = vshll.u32 %v155, 8
    %v196 = vmul.u32.u64.compose %v195, %v194
    %v197 = vextract.low.u32 %v196
    %v198 = vextract.high.u32 %v196
    %v199 = vmul.u32.u64.compose %v195, %v190
    %v200 = vextract.low.u32 %v199
    %v201 = vextract.high.u32 %v199
    %v202 = vmul.u32 %v195, %v186
    %v203 = vadd.s32 %v198, %v200
    %vm204 = vc.u32 %v198, %v200
    %v205 = vadd.s32 %v201, 1
    %v206 = vsel %vm204, %v205, %v201
    %v207 = vadd.s32 %v202, %v206
    %v208 = vadd.s32 %v207, 536870912
    %v209 = vshrl.u32 %v208, 30
    %v210 = vshll.u32 %v209, 30
    %v211 = vsub.s32 %v207, %v210
    %vm212 = vcmp.lt.s32.totalorder %v211, 0
    %v213 = vsub.s32 0, %v211
    %v214 = vsel %vm212, %v213, %v211
    %v215 = vclz %v214
    %v216 = vsub.s32 %v215, 2
    %vm217 = vcmp.gt.s32.totalorder 0, %v216
    %v218 = vsel %vm217, 0, %v216
    %v219 = vsub.s32 32, %v218
    %v220 = vshll.u32 %v211, %v218
    %v221 = vshrl.u32 %v203, %v219
    %v222 = vor.u32 %v220, %v221
    %v223 = vsub.s32 4294967266, %v218
    %v224 = vadd.s32 %v223, 127
    %v225 = vshll.u32 %v224, 23
    %v226 = vor.u32 4788187, %v225
    %v227 = vand.u32 2147483647, %v226
    %v229 = vcvt.s32.f32 %v222
    %v230 = vmul.f32 %v229, %v227
    %v231 = vxor.u32 %v230, 2147483648
    %v232 = vsel %vm149, %v231, %v230
    %v233 = vsub.s32 4, %v209
    %v234 = vsel %vm149, %v233, %v209
    %v235 = vsel %vm148, %v40, %v232
    %v236 = vsel %vm148, 0, %v234
    %v237 = vcosq.f32.pop %v235
    %v238 = vsinq.f32.pop %v235
    %vm239 = vweird.f32 %v40
    %v240 = vand.u32 %v236, 3
    %vm241 = vcmp.lt.s32.totalorder %v240, 2
    %vm242 = vcmp.eq.s32.totalorder %v240, 0
    %v243 = vxor.u32 %v238, 2147483648
    %v244 = vsel %vm242, %v237, %v243
    %vm245 = vcmp.eq.s32.totalorder %v240, 2
    %v246 = vxor.u32 %v237, 2147483648
    %v247 = vsel %vm245, %v246, %v238
    %v248 = vsel %vm241, %v244, %v247
    %v249 = vsel %vm239, nan, %v248
    %v250 = vld [vmem:[%s3] sm:$0xff]
    %v251 = vld [vmem:[%s3 + $0x8] sm:$0xff]
    %vm252 = vcmask 130048
    %v254 = vsel %vm252, %v249, 0
    %256 = vmatprep.subr.mxu0 0.0
    %257 = vmatpush1.msra.mxu0 %v250
    %258 = vmatprep.subr.mxu0 0.0
    %259 = vmatpush1.msra.mxu0 %v251
    %260 = vmatprep.subr.mxu0 0.0
    %261 = vmatpush1.msra.mxu0 0.0
    %262 = vmatprep.subr.mxu0 0.0
    %263 = vmatpush1.msra.mxu0 0.0
    %264 = vmatprep.subr.mxu0 0.0
    %265 = vmatpush1.msra.mxu0 0.0
    %266 = vmatprep.subr.mxu0 0.0
    %267 = vmatpush1.msra.mxu0 0.0
    %268 = vmatprep.subr.mxu0 0.0
    %269 = vmatpush1.msra.mxu0 0.0
    %270 = vmatprep.subr.mxu0 0.0
    %271 = vmatpush1.msra.mxu0 0.0
    %272 = vmatprep.subr.mxu0 0.0
    %273 = vmatpush1.msra.mxu0 0.0
    %274 = vmatprep.subr.mxu0 0.0
    %275 = vmatpush1.msra.mxu0 0.0
    %276 = vmatprep.subr.mxu0 0.0
    %277 = vmatpush1.msra.mxu0 0.0
    %278 = vmatprep.subr.mxu0 0.0
    %279 = vmatpush1.msra.mxu0 0.0
    %280 = vmatprep.subr.mxu0 0.0
    %281 = vmatpush1.msra.mxu0 0.0
    %282 = vmatprep.subr.mxu0 0.0
    %283 = vmatpush1.msra.mxu0 0.0
    %284 = vmatprep.subr.mxu0 0.0
    %285 = vmatpush1.msra.mxu0 0.0
    %286 = vmatprep.subr.mxu0 0.0
    %287 = vmatpush1.msra.mxu0 0.0
    %288 = vmatprep.subr.mxu0 0.0
    %289 = vmatpush1.msra.mxu0 0.0
    %290 = vmatprep.subr.mxu0 0.0
    %291 = vmatpush1.msra.mxu0 0.0
    %292 = vmatprep.subr.mxu0 0.0
    %293 = vmatpush1.msra.mxu0 0.0
    %294 = vmatprep.subr.mxu0 0.0
    %295 = vmatpush1.msra.mxu0 0.0
    %296 = vmatprep.subr.mxu0 0.0
    %297 = vmatpush1.msra.mxu0 0.0
    %298 = vmatprep.subr.mxu0 0.0
    %299 = vmatpush1.msra.mxu0 0.0
    %300 = vmatprep.subr.mxu0 0.0
    %301 = vmatpush1.msra.mxu0 0.0
    %302 = vmatprep.subr.mxu0 0.0
    %303 = vmatpush1.msra.mxu0 0.0
    %304 = vmatprep.subr.mxu0 0.0
    %305 = vmatpush1.msra.mxu0 0.0
    %306 = vmatprep.subr.mxu0 0.0
    %307 = vmatpush1.msra.mxu0 0.0
    %308 = vmatprep.subr.mxu0 0.0
    %309 = vmatpush1.msra.mxu0 0.0
    %310 = vmatprep.subr.mxu0 0.0
    %311 = vmatpush1.msra.mxu0 0.0
    %312 = vmatprep.subr.mxu0 0.0
    %313 = vmatpush1.msra.mxu0 0.0
    %314 = vmatprep.subr.mxu0 0.0
    %315 = vmatpush1.msra.mxu0 0.0
    %316 = vmatprep.subr.mxu0 0.0
    %317 = vmatpush1.msra.mxu0 0.0
    %318 = vmatprep.subr.mxu0 0.0
    %319 = vmatpush1.msra.mxu0 0.0
    %320 = vmatprep.mubr.f32.mxu0 0.0
    %321 = vmatmul.mubr.f32.gmra.mrb[0].mxu0 %v254
    %v322 = vpop.f32.mrb[0].mxu0
    %v323 = vadd.f32 0.0, %v322
    %v324 = vpop.f32.mrb[0].mxu0
    %325 = vdwg.mxu0
    %v327 = vsel %vm252, %v144, 0
    %329 = vmatprep.subr.mxu0 0.0
    %330 = vmatpush1.msra.mxu0 %v145
    %331 = vmatprep.subr.mxu0 0.0
    %332 = vmatpush1.msra.mxu0 %v146
    %333 = vmatprep.subr.mxu0 0.0
    %334 = vmatpush1.msra.mxu0 0.0
    %335 = vmatprep.subr.mxu0 0.0
    %336 = vmatpush1.msra.mxu0 0.0
    %337 = vmatprep.subr.mxu0 0.0
    %338 = vmatpush1.msra.mxu0 0.0
    %339 = vmatprep.subr.mxu0 0.0
    %340 = vmatpush1.msra.mxu0 0.0
    %341 = vmatprep.subr.mxu0 0.0
    %342 = vmatpush1.msra.mxu0 0.0
    %343 = vmatprep.subr.mxu0 0.0
    %344 = vmatpush1.msra.mxu0 0.0
    %345 = vmatprep.subr.mxu0 0.0
    %346 = vmatpush1.msra.mxu0 0.0
    %347 = vmatprep.subr.mxu0 0.0
    %348 = vmatpush1.msra.mxu0 0.0
    %349 = vmatprep.subr.mxu0 0.0
    %350 = vmatpush1.msra.mxu0 0.0
    %351 = vmatprep.subr.mxu0 0.0
    %352 = vmatpush1.msra.mxu0 0.0
    %353 = vmatprep.subr.mxu0 0.0
    %354 = vmatpush1.msra.mxu0 0.0
    %355 = vmatprep.subr.mxu0 0.0
    %356 = vmatpush1.msra.mxu0 0.0
    %357 = vmatprep.subr.mxu0 0.0
    %358 = vmatpush1.msra.mxu0 0.0
    %359 = vmatprep.subr.mxu0 0.0
    %360 = vmatpush1.msra.mxu0 0.0
    %361 = vmatprep.subr.mxu0 0.0
    %362 = vmatpush1.msra.mxu0 0.0
    %363 = vmatprep.subr.mxu0 0.0
    %364 = vmatpush1.msra.mxu0 0.0
    %365 = vmatprep.subr.mxu0 0.0
    %366 = vmatpush1.msra.mxu0 0.0
    %367 = vmatprep.subr.mxu0 0.0
    %368 = vmatpush1.msra.mxu0 0.0
    %369 = vmatprep.subr.mxu0 0.0
    %370 = vmatpush1.msra.mxu0 0.0
    %371 = vmatprep.subr.mxu0 0.0
    %372 = vmatpush1.msra.mxu0 0.0
    %373 = vmatprep.subr.mxu0 0.0
    %374 = vmatpush1.msra.mxu0 0.0
    %375 = vmatprep.subr.mxu0 0.0
    %376 = vmatpush1.msra.mxu0 0.0
    %377 = vmatprep.subr.mxu0 0.0
    %378 = vmatpush1.msra.mxu0 0.0
    %379 = vmatprep.subr.mxu0 0.0
    %380 = vmatpush1.msra.mxu0 0.0
    %381 = vmatprep.subr.mxu0 0.0
    %382 = vmatpush1.msra.mxu0 0.0
    %383 = vmatprep.subr.mxu0 0.0
    %384 = vmatpush1.msra.mxu0 0.0
    %385 = vmatprep.subr.mxu0 0.0
    %386 = vmatpush1.msra.mxu0 0.0
    %387 = vmatprep.subr.mxu0 0.0
    %388 = vmatpush1.msra.mxu0 0.0
    %389 = vmatprep.subr.mxu0 0.0
    %390 = vmatpush1.msra.mxu0 0.0
    %391 = vmatprep.subr.mxu0 0.0
    %392 = vmatpush1.msra.mxu0 0.0
    %393 = vmatprep.mubr.f32.mxu0 0.0
    %394 = vmatmul.mubr.f32.gmra.mrb[0].mxu0 %v327
    %v395 = vpop.f32.mrb[0].mxu0
    %v396 = vadd.f32 %v323, %v395
    %v397 = vpop.f32.mrb[0].mxu0
    %398 = vdwg.mxu0
    %v399 = vld [vmem:[%s4] sm:$0x1]
    %v401 = vlaneseq
    %v402 = vshrl.u32 %v401, 7
    %v403 = vsub.s32 0, %v402
    %v404 = vrot.slane %v399, %v403
    %v406 = vadd.f32 %v396, %v404
    %v407 = vmax.f32 %v406, 0.0
    %v408 = vand.u32 2147483647, %v406
    %v409 = vsub.f32 0.0, %v408
    %v410 = vmul.f32 %v409, 1.442695
    %v411 = vpow.pop %v410
    %v412 = vadd.f32 %v411, 1.0
    %v413 = vlog2.pop %v412
    %v414 = vmul.f32 %v413, 0.6931472
    %v415 = vadd.f32 %v407, %v414
    %v416 = vtanh.pop %v415
    %v417 = vmul.f32 %v406, %v416
    %v418 = vld [vmem:[%s5] sm:$0xff]
    %v419 = vld [vmem:[%s5 + $0x8] sm:$0xff]
    %v420 = vld [vmem:[%s5 + $0x10] sm:$0xff]
    %v421 = vld [vmem:[%s5 + $0x18] sm:$0xff]
    %v422 = vld [vmem:[%s5 + $0x20] sm:$0xff]
    %v423 = vld [vmem:[%s5 + $0x28] sm:$0xff]
    %v424 = vld [vmem:[%s5 + $0x30] sm:$0xff]
    %v425 = vld [vmem:[%s5 + $0x38] sm:$0xff]
    %v426 = vld [vmem:[%s5 + $0x40] sm:$0xff]
    %v427 = vld [vmem:[%s5 + $0x48] sm:$0xff]
    %v428 = vld [vmem:[%s5 + $0x50] sm:$0xff]
    %v429 = vld [vmem:[%s5 + $0x58] sm:$0xff]
    %v430 = vld [vmem:[%s5 + $0x60] sm:$0xff]
    %v431 = vld [vmem:[%s5 + $0x68] sm:$0xff]
    %v432 = vld [vmem:[%s5 + $0x70] sm:$0xff]
    %v433 = vld [vmem:[%s5 + $0x78] sm:$0xff]
    %v434 = vld [vmem:[%s6] sm:$0x1]
    %v436 = vlaneseq
    %v437 = vshrl.u32 %v436, 7
    %v438 = vsub.s32 0, %v437
    %v439 = vrot.slane %v434, %v438
    %441 = vmatprep.subr.mxu0 0.0
    %442 = vmatpush1.msra.mxu0 %v418
    %443 = vmatprep.subr.mxu0 0.0
    %444 = vmatpush1.msra.mxu0 %v419
    %445 = vmatprep.subr.mxu0 0.0
    %446 = vmatpush1.msra.mxu0 %v420
    %447 = vmatprep.subr.mxu0 0.0
    %448 = vmatpush1.msra.mxu0 %v421
    %449 = vmatprep.subr.mxu0 0.0
    %450 = vmatpush1.msra.mxu0 %v422
    %451 = vmatprep.subr.mxu0 0.0
    %452 = vmatpush1.msra.mxu0 %v423
    %453 = vmatprep.subr.mxu0 0.0
    %454 = vmatpush1.msra.mxu0 %v424
    %455 = vmatprep.subr.mxu0 0.0
    %456 = vmatpush1.msra.mxu0 %v425
    %457 = vmatprep.subr.mxu0 0.0
    %458 = vmatpush1.msra.mxu0 %v426
    %459 = vmatprep.subr.mxu0 0.0
    %460 = vmatpush1.msra.mxu0 %v427
    %461 = vmatprep.subr.mxu0 0.0
    %462 = vmatpush1.msra.mxu0 %v428
    %463 = vmatprep.subr.mxu0 0.0
    %464 = vmatpush1.msra.mxu0 %v429
    %465 = vmatprep.subr.mxu0 0.0
    %466 = vmatpush1.msra.mxu0 %v430
    %467 = vmatprep.subr.mxu0 0.0
    %468 = vmatpush1.msra.mxu0 %v431
    %469 = vmatprep.subr.mxu0 0.0
    %470 = vmatpush1.msra.mxu0 %v432
    %471 = vmatprep.subr.mxu0 0.0
    %472 = vmatpush1.msra.mxu0 %v433
    %473 = vmatprep.subr.mxu0 0.0
    %474 = vmatpush1.msra.mxu0 0.0
    %475 = vmatprep.subr.mxu0 0.0
    %476 = vmatpush1.msra.mxu0 0.0
    %477 = vmatprep.subr.mxu0 0.0
    %478 = vmatpush1.msra.mxu0 0.0
    %479 = vmatprep.subr.mxu0 0.0
    %480 = vmatpush1.msra.mxu0 0.0
    %481 = vmatprep.subr.mxu0 0.0
    %482 = vmatpush1.msra.mxu0 0.0
    %483 = vmatprep.subr.mxu0 0.0
    %484 = vmatpush1.msra.mxu0 0.0
    %485 = vmatprep.subr.mxu0 0.0
    %486 = vmatpush1.msra.mxu0 0.0
    %487 = vmatprep.subr.mxu0 0.0
    %488 = vmatpush1.msra.mxu0 0.0
    %489 = vmatprep.subr.mxu0 0.0
    %490 = vmatpush1.msra.mxu0 0.0
    %491 = vmatprep.subr.mxu0 0.0
    %492 = vmatpush1.msra.mxu0 0.0
    %493 = vmatprep.subr.mxu0 0.0
    %494 = vmatpush1.msra.mxu0 0.0
    %495 = vmatprep.subr.mxu0 0.0
    %496 = vmatpush1.msra.mxu0 0.0
    %497 = vmatprep.subr.mxu0 0.0
    %498 = vmatpush1.msra.mxu0 0.0
    %499 = vmatprep.subr.mxu0 0.0
    %500 = vmatpush1.msra.mxu0 0.0
    %501 = vmatprep.subr.mxu0 0.0
    %502 = vmatpush1.msra.mxu0 0.0
    %503 = vmatprep.subr.mxu0 0.0
    %504 = vmatpush1.msra.mxu0 0.0
    %505 = vmatprep.mubr.f32.mxu0 0.0
    %506 = vmatmul.mubr.f32.gmra.mrb[0].mxu0 %v417
    %v507 = vpop.f32.mrb[0].mxu0
    %v508 = vadd.f32 %v439, %v507
    %v509 = vpop.f32.mrb[0].mxu0
    %510 = vdwg.mxu0
    %vm511 = vcmask 254976
    %512 = vst.msk [vmem:[#allocation2] sm:$0x3] %vm511, %v508
    // Predicated region
    $region30: #{tpu_custom_call.1} parent=1 // pred_check
      _
    $region31: #{tpu_custom_call.1} parent=1 // pred_check_branch
      %514 = sbr.rel (0) target = $region33
    $region32: #{tpu_custom_call.1} parent=1 // pred_region
      %s516 = ssub.s32 32, 32
      %517 = vsyncadd [#allocation3], %s516
      %s519 = sshll.u32 [#allocation2], 4
      %s520 = int_to_ptr.vmem [resolvable:$true] %s519
      %522 = dma.vmem_to_hbm [thread:$0]  %s520, 32, %s7, [#allocation3]
    $region33: #{tpu_custom_call.1} parent=1 // pred_fallthru
      _
    // Predicated region
    $region34: #{tpu_custom_call.1} parent=1 // pred_check
      _
    $region35: #{tpu_custom_call.1} parent=1 // pred_check_branch
      %524 = sbr.rel (0) target = $region37
    $region36: #{tpu_custom_call.1} parent=1 // pred_region
      %525 = dma.done [#allocation3], 32
    $region37: #{tpu_custom_call.1} parent=1 // pred_fallthru
      _
    %526 = vsyncpa [#allocation3], 1

</llo_original>
